<compile_context>
chip_gen: v7x
topology: tpu7x:2x2x1
jax: 0.10.0
libtpu: 0.0.40
codegen_flags: <defaults>
</compile_context>

<pallas_src>
import math

import jax
import jax.numpy as jnp
from jax.experimental import pallas as pl
from jax.experimental.pallas import tpu as pltpu


# ----------------------------- Pallas kernel ------------------------------

def _causal_conv(pad_ref, x, kern, skip_row, L):
    """acc[l,h] = skip_row[0,h]*x[l,h] + sum_{j=0..l} kern[j,h]*x[l-j,h].

    pad_ref is a (2L, Dm) f32 VMEM scratch whose top half is already zero;
    its bottom half is (re)written with x so every lag-j shifted copy of x is
    the static window pad_ref[L-j : 2L-j, :] (zeros flow in for l < j).
    The SSM skip term is folded into the accumulator init.
    """
    pad_ref[L:2 * L, :] = x
    acc = (skip_row + kern[0:1, :]) * x          # skip + lag-0 term
    # TODO(synk): for long L (>~ few hundred) this O(L^2) shift-and-accumulate
    # should become an L-blocked conv with a halo / carried state (or keep the
    # FFT path outside the kernel); a full unroll is fine at small L.
    for j in range(1, L):
        acc = acc + kern[j:j + 1, :] * pad_ref[L - j:2 * L - j, :]
    return acc


def h3_kernel(u_ref, wqkv_ref, bqkv_ref, wo_ref, bo_ref,
              kshift_ref, kssm_ref, kD_ref, Dp_ref, o_ref, pad_ref):
    L, Dm = u_ref.shape

    # Zero the top half of the conv pad buffer (bottom half is overwritten per
    # conv call).  Done every grid step: scratch is uninitialized, and with the
    # batch axis "parallel" different cores see disjoint grid subsets.
    pad_ref[0:L, :] = jnp.zeros((L, Dm), jnp.float32)

    # Fused q/k/v projection: one wide MXU matmul, bf16 in / f32 accumulate.
    u_bf = u_ref[...].astype(jnp.bfloat16)
    qkv = jnp.dot(u_bf, wqkv_ref[...], preferred_element_type=jnp.float32)
    qkv = qkv + bqkv_ref[...]
    q = qkv[:, 0 * Dm:1 * Dm]
    k = qkv[:, 1 * Dm:2 * Dm]
    v = qkv[:, 2 * Dm:3 * Dm]

    # Shift-SSM branch on k (causal conv, ssm_k_D skip folded into acc).
    k = _causal_conv(pad_ref, k, kshift_ref[...], kD_ref[...], L)

    # head_dim == 1: kv = k * v elementwise per channel.
    kv = k * v

    # Diagonal-SSM branch on kv (causal conv, D skip folded in), gated by q.
    y = _causal_conv(pad_ref, kv, kssm_ref[...], Dp_ref[...], L) * q

    # Output projection: plain A @ B with pre-transposed bf16 weight.
    out = jnp.dot(y.astype(jnp.bfloat16), wo_ref[...],
                  preferred_element_type=jnp.float32)
    o_ref[...] = (out + bo_ref[...]).astype(o_ref.dtype)


# ------------------------------ JAX wrapper --------------------------------

@jax.jit
def h3_forward(u, p):
    B, L, Dm = u.shape

    # Pre-pack / pre-transpose parameters outside the kernel (done once):
    #  - q/k/v weights concatenated into a single (Dm, 3Dm) bf16 matrix so the
    #    kernel does one wide matmul and splits q/k/v by static lane slices.
    #  - output weight pre-transposed so the kernel contracts A @ B directly
    #    (no in-kernel weight transpose / relayout).
    wqkv = jnp.concatenate([p['wq'].T, p['wk'].T, p['wv'].T], axis=1)
    wqkv = wqkv.astype(jnp.bfloat16)                                  # (Dm, 3Dm)
    bqkv = jnp.concatenate([p['bq'], p['bk'], p['bv']]).reshape(1, 3 * Dm)
    wo = p['wo'].T.astype(jnp.bfloat16)                               # (Dm, Dm)
    bo = p['bo'].reshape(1, Dm)
    kshift = p['ssm_k_kernel'].T                                      # (L, Dm)
    kssm = p['ssm_kernel'].T                                          # (L, Dm) (head_dim=1)
    kD = p['ssm_k_D'].reshape(1, Dm)
    Dp = p['D'].reshape(1, Dm)

    def const_spec(shape):
        return pl.BlockSpec(shape, lambda b: (0, 0))

    seq_spec = pl.BlockSpec((None, L, Dm), lambda b: (b, 0, 0))

    return pl.pallas_call(
        h3_kernel,
        out_shape=jax.ShapeDtypeStruct((B, L, Dm), jnp.float32),
        grid=(B,),
        in_specs=[
            seq_spec,                       # u: one (L, Dm) sequence per step
            const_spec((Dm, 3 * Dm)),       # fused q/k/v weight (bf16)
            const_spec((1, 3 * Dm)),        # fused q/k/v bias (f32)
            const_spec((Dm, Dm)),           # output weight (bf16)
            const_spec((1, Dm)),            # output bias
            const_spec((L, Dm)),            # shift-SSM conv kernel
            const_spec((L, Dm)),            # diagonal-SSM conv kernel
            const_spec((1, Dm)),            # ssm_k_D skip
            const_spec((1, Dm)),            # D skip
        ],
        out_specs=seq_spec,
        scratch_shapes=[pltpu.VMEM((2 * L, Dm), jnp.float32)],
        compiler_params=pltpu.CompilerParams(
            dimension_semantics=("parallel",),
            vmem_limit_bytes=32 * 1024 * 1024),
    )(u, wqkv, bqkv, wo, bo, kshift, kssm, kD, Dp)


# --------------------------- pure-JAX reference ----------------------------

def h3_reference(u, p):
    """Mirrors the PyTorch FFT path (head_dim=1, inference_params=None), f32."""
    B, L, Dm = u.shape
    q = u @ p['wq'].T + p['bq']
    k = u @ p['wk'].T + p['bk']
    v = u @ p['wv'].T + p['bv']
    q, k, v = [jnp.transpose(x, (0, 2, 1)) for x in (q, k, v)]   # (B, D, L)
    fft_size = 2 * L
    kk_f = jnp.fft.rfft(p['ssm_k_kernel'], n=fft_size)
    k_f = jnp.fft.rfft(k, n=fft_size)
    shift_k = jnp.fft.irfft(kk_f * k_f, n=fft_size)[..., :L]
    k = shift_k + p['ssm_k_D'][:, None] * k
    kv = k * v
    kv_f = jnp.fft.rfft(kv, n=fft_size) / fft_size
    sk_f = jnp.fft.rfft(p['ssm_kernel'], n=fft_size)
    y = jnp.fft.irfft(kv_f * sk_f, n=fft_size, norm='forward')[..., :L]
    y = y + kv * p['D'][:, None]
    y = y * q
    y = jnp.transpose(y, (0, 2, 1))                               # (B, L, D)
    return y @ p['wo'].T + p['bo']


# --------------------------------- main -------------------------------------

if __name__ == "__main__":
    B, L, d_model = 4, 16, 128      # d_model = 128 -> lane-dense tiles/stores
    head_dim = 1
    H = d_model // head_dim          # = d_model when head_dim == 1

    key = jax.random.PRNGKey(0)
    ks = jax.random.split(key, 12)
    bound = 1.0 / math.sqrt(d_model)

    def lin_w(k):
        return jax.random.uniform(k, (d_model, d_model), jnp.float32, -bound, bound)

    def lin_b(k):
        return jax.random.uniform(k, (d_model,), jnp.float32, -bound, bound)

    # TODO(synk): SSKernel (HiPPO / shift SSM) kernel materialization
    # (Cauchy/Vandermonde + iFFT) has no clean Pallas equivalent here; the
    # (H, L) / (d_model, L) convolution kernels it would produce are
    # synthesized as deterministic random inputs instead.
    params = {
        'wq': lin_w(ks[0]), 'bq': lin_b(ks[1]),
        'wk': lin_w(ks[2]), 'bk': lin_b(ks[3]),
        'wv': lin_w(ks[4]), 'bv': lin_b(ks[5]),
        'wo': lin_w(ks[6]), 'bo': lin_b(ks[7]),
        'ssm_k_kernel': 0.1 * jax.random.normal(ks[8], (d_model, L), jnp.float32),
        'ssm_kernel':   0.1 * jax.random.normal(ks[9], (H, L), jnp.float32),
        'ssm_k_D': jax.random.normal(ks[10], (d_model,), jnp.float32),
        'D':       jax.random.normal(ks[11], (H,), jnp.float32),
    }

    u = jax.random.normal(jax.random.PRNGKey(42), (B, L, d_model), jnp.float32)

    out = jax.block_until_ready(h3_forward(u, params))
    ref = jax.block_until_ready(h3_reference(u, params))

    assert out.shape == (B, L, d_model)
    max_err = float(jnp.max(jnp.abs(out - ref)))
    # bf16 matmul operands (f32 accumulation / f32 conv & gating) vs f32 reference.
    assert jnp.allclose(out, ref, rtol=5e-2, atol=5e-2), \
        f"max abs err {max_err} (ref max {float(jnp.max(jnp.abs(ref)))})"

    print("KERNEL_OK")
</pallas_src>

<mosaic_0001>
module attributes {stable_mosaic.version = 11 : i64} {
  func.func @h3_kernel(%arg0: i32, %arg1: memref<1x16x128xf32, #tpu.memory_space<vmem>>, %arg2: memref<128x384xbf16, #tpu.memory_space<vmem>>, %arg3: memref<1x384xf32, #tpu.memory_space<vmem>>, %arg4: memref<128x128xbf16, #tpu.memory_space<vmem>>, %arg5: memref<1x128xf32, #tpu.memory_space<vmem>>, %arg6: memref<16x128xf32, #tpu.memory_space<vmem>>, %arg7: memref<16x128xf32, #tpu.memory_space<vmem>>, %arg8: memref<1x128xf32, #tpu.memory_space<vmem>>, %arg9: memref<1x128xf32, #tpu.memory_space<vmem>>, %arg10: memref<1x16x128xf32, #tpu.memory_space<vmem>>, %arg11: memref<32x128xf32, #tpu.memory_space<vmem>>) attributes {dimension_semantics = [#tpu.dimension_semantics<parallel>], iteration_bounds = array<i64: 4>, scalar_prefetch = 0 : i64, scratch_operands = 1 : i64, tpu.core_type = #tpu.core_type<tc>, window_params = [{transform_indices = @transform_0, window_bounds = array<i64: 1, 16, 128>}, {pipeline_mode = #tpu.pipeline_mode<synchronous>, transform_indices = @transform_1, window_bounds = array<i64: 128, 384>}, {pipeline_mode = #tpu.pipeline_mode<synchronous>, transform_indices = @transform_2, window_bounds = array<i64: 1, 384>}, {pipeline_mode = #tpu.pipeline_mode<synchronous>, transform_indices = @transform_3, window_bounds = array<i64: 128, 128>}, {pipeline_mode = #tpu.pipeline_mode<synchronous>, transform_indices = @transform_4, window_bounds = array<i64: 1, 128>}, {pipeline_mode = #tpu.pipeline_mode<synchronous>, transform_indices = @transform_5, window_bounds = array<i64: 16, 128>}, {pipeline_mode = #tpu.pipeline_mode<synchronous>, transform_indices = @transform_6, window_bounds = array<i64: 16, 128>}, {pipeline_mode = #tpu.pipeline_mode<synchronous>, transform_indices = @transform_7, window_bounds = array<i64: 1, 128>}, {pipeline_mode = #tpu.pipeline_mode<synchronous>, transform_indices = @transform_8, window_bounds = array<i64: 1, 128>}, {transform_indices = @transform_9, window_bounds = array<i64: 1, 16, 128>}]} {
    %cst = arith.constant 0.000000e+00 : f32
    %0 = vector.broadcast %cst : f32 to vector<16x128xf32>
    %c0 = arith.constant 0 : index
    %c0_0 = arith.constant 0 : index
    %1 = vector.load %arg11[%c0, %c0_0] : memref<32x128xf32, #tpu.memory_space<vmem>>, vector<16x128xf32>
    tpu.vector_store %arg11[%c0, %c0_0], %0 {strides = array<i32>} : memref<32x128xf32, #tpu.memory_space<vmem>>, vector<16x128xf32>,
    %c0_1 = arith.constant 0 : index
    %c0_2 = arith.constant 0 : index
    %c0_3 = arith.constant 0 : index
    %2 = vector.load %arg1[%c0_1, %c0_2, %c0_3] : memref<1x16x128xf32, #tpu.memory_space<vmem>>, vector<1x16x128xf32>
    %3 = vector.shape_cast %2 : vector<1x16x128xf32> to vector<16x128xf32>
    %4 = arith.truncf %3 : vector<16x128xf32> to vector<16x128xbf16>
    %c0_4 = arith.constant 0 : index
    %c0_5 = arith.constant 0 : index
    %5 = vector.load %arg2[%c0_4, %c0_5] : memref<128x384xbf16, #tpu.memory_space<vmem>>, vector<128x384xbf16>
    %cst_6 = arith.constant dense<0.000000e+00> : vector<16x384xf32>
    %6 = tpu.matmul %4, %5, %cst_6 {dimension_numbers = #tpu.dot_dimension_numbers<[1], [0], [0], [1], [0, 0, 1, 1], [], []>} : vector<16x128xbf16>, vector<128x384xbf16>, vector<16x384xf32> -> vector<16x384xf32>
    %c0_7 = arith.constant 0 : index
    %c0_8 = arith.constant 0 : index
    %7 = vector.load %arg3[%c0_7, %c0_8] : memref<1x384xf32, #tpu.memory_space<vmem>>, vector<1x384xf32>
    %8 = vector.broadcast %7 : vector<1x384xf32> to vector<16x384xf32>
    %9 = arith.addf %6, %8 : vector<16x384xf32>
    %10 = vector.extract_strided_slice %9 {offsets = [0, 0], sizes = [16, 128], strides = [1, 1]} : vector<16x384xf32> to vector<16x128xf32>
    %11 = vector.extract_strided_slice %9 {offsets = [0, 128], sizes = [16, 128], strides = [1, 1]} : vector<16x384xf32> to vector<16x128xf32>
    %12 = vector.extract_strided_slice %9 {offsets = [0, 256], sizes = [16, 128], strides = [1, 1]} : vector<16x384xf32> to vector<16x128xf32>
    %c0_9 = arith.constant 0 : index
    %c0_10 = arith.constant 0 : index
    %13 = vector.load %arg6[%c0_9, %c0_10] : memref<16x128xf32, #tpu.memory_space<vmem>>, vector<16x128xf32>
    %c0_11 = arith.constant 0 : index
    %c0_12 = arith.constant 0 : index
    %14 = vector.load %arg8[%c0_11, %c0_12] : memref<1x128xf32, #tpu.memory_space<vmem>>, vector<1x128xf32>
    %c16 = arith.constant 16 : index
    %c0_13 = arith.constant 0 : index
    %15 = vector.load %arg11[%c16, %c0_13] : memref<32x128xf32, #tpu.memory_space<vmem>>, vector<16x128xf32>
    tpu.vector_store %arg11[%c16, %c0_13], %11 {strides = array<i32>} : memref<32x128xf32, #tpu.memory_space<vmem>>, vector<16x128xf32>,
    %16 = vector.extract_strided_slice %13 {offsets = [0, 0], sizes = [1, 128], strides = [1, 1]} : vector<16x128xf32> to vector<1x128xf32>
    %17 = arith.addf %14, %16 : vector<1x128xf32>
    %18 = vector.broadcast %17 : vector<1x128xf32> to vector<16x128xf32>
    %19 = arith.mulf %18, %11 : vector<16x128xf32>
    %20 = vector.extract_strided_slice %13 {offsets = [1, 0], sizes = [1, 128], strides = [1, 1]} : vector<16x128xf32> to vector<1x128xf32>
    %c15 = arith.constant 15 : index
    %c0_14 = arith.constant 0 : index
    %21 = vector.load %arg11[%c15, %c0_14] : memref<32x128xf32, #tpu.memory_space<vmem>>, vector<16x128xf32>
    %22 = vector.broadcast %20 : vector<1x128xf32> to vector<16x128xf32>
    %23 = arith.mulf %22, %21 : vector<16x128xf32>
    %24 = arith.addf %19, %23 : vector<16x128xf32>
    %25 = vector.extract_strided_slice %13 {offsets = [2, 0], sizes = [1, 128], strides = [1, 1]} : vector<16x128xf32> to vector<1x128xf32>
    %c14 = arith.constant 14 : index
    %c0_15 = arith.constant 0 : index
    %26 = vector.load %arg11[%c14, %c0_15] : memref<32x128xf32, #tpu.memory_space<vmem>>, vector<16x128xf32>
    %27 = vector.broadcast %25 : vector<1x128xf32> to vector<16x128xf32>
    %28 = arith.mulf %27, %26 : vector<16x128xf32>
    %29 = arith.addf %24, %28 : vector<16x128xf32>
    %30 = vector.extract_strided_slice %13 {offsets = [3, 0], sizes = [1, 128], strides = [1, 1]} : vector<16x128xf32> to vector<1x128xf32>
    %c13 = arith.constant 13 : index
    %c0_16 = arith.constant 0 : index
    %31 = vector.load %arg11[%c13, %c0_16] : memref<32x128xf32, #tpu.memory_space<vmem>>, vector<16x128xf32>
    %32 = vector.broadcast %30 : vector<1x128xf32> to vector<16x128xf32>
    %33 = arith.mulf %32, %31 : vector<16x128xf32>
    %34 = arith.addf %29, %33 : vector<16x128xf32>
    %35 = vector.extract_strided_slice %13 {offsets = [4, 0], sizes = [1, 128], strides = [1, 1]} : vector<16x128xf32> to vector<1x128xf32>
    %c12 = arith.constant 12 : index
    %c0_17 = arith.constant 0 : index
    %36 = vector.load %arg11[%c12, %c0_17] : memref<32x128xf32, #tpu.memory_space<vmem>>, vector<16x128xf32>
    %37 = vector.broadcast %35 : vector<1x128xf32> to vector<16x128xf32>
    %38 = arith.mulf %37, %36 : vector<16x128xf32>
    %39 = arith.addf %34, %38 : vector<16x128xf32>
    %40 = vector.extract_strided_slice %13 {offsets = [5, 0], sizes = [1, 128], strides = [1, 1]} : vector<16x128xf32> to vector<1x128xf32>
    %c11 = arith.constant 11 : index
    %c0_18 = arith.constant 0 : index
    %41 = vector.load %arg11[%c11, %c0_18] : memref<32x128xf32, #tpu.memory_space<vmem>>, vector<16x128xf32>
    %42 = vector.broadcast %40 : vector<1x128xf32> to vector<16x128xf32>
    %43 = arith.mulf %42, %41 : vector<16x128xf32>
    %44 = arith.addf %39, %43 : vector<16x128xf32>
    %45 = vector.extract_strided_slice %13 {offsets = [6, 0], sizes = [1, 128], strides = [1, 1]} : vector<16x128xf32> to vector<1x128xf32>
    %c10 = arith.constant 10 : index
    %c0_19 = arith.constant 0 : index
    %46 = vector.load %arg11[%c10, %c0_19] : memref<32x128xf32, #tpu.memory_space<vmem>>, vector<16x128xf32>
    %47 = vector.broadcast %45 : vector<1x128xf32> to vector<16x128xf32>
    %48 = arith.mulf %47, %46 : vector<16x128xf32>
    %49 = arith.addf %44, %48 : vector<16x128xf32>
    %50 = vector.extract_strided_slice %13 {offsets = [7, 0], sizes = [1, 128], strides = [1, 1]} : vector<16x128xf32> to vector<1x128xf32>
    %c9 = arith.constant 9 : index
    %c0_20 = arith.constant 0 : index
    %51 = vector.load %arg11[%c9, %c0_20] : memref<32x128xf32, #tpu.memory_space<vmem>>, vector<16x128xf32>
    %52 = vector.broadcast %50 : vector<1x128xf32> to vector<16x128xf32>
    %53 = arith.mulf %52, %51 : vector<16x128xf32>
    %54 = arith.addf %49, %53 : vector<16x128xf32>
    %55 = vector.extract_strided_slice %13 {offsets = [8, 0], sizes = [1, 128], strides = [1, 1]} : vector<16x128xf32> to vector<1x128xf32>
    %c8 = arith.constant 8 : index
    %c0_21 = arith.constant 0 : index
    %56 = vector.load %arg11[%c8, %c0_21] : memref<32x128xf32, #tpu.memory_space<vmem>>, vector<16x128xf32>
    %57 = vector.broadcast %55 : vector<1x128xf32> to vector<16x128xf32>
    %58 = arith.mulf %57, %56 : vector<16x128xf32>
    %59 = arith.addf %54, %58 : vector<16x128xf32>
    %60 = vector.extract_strided_slice %13 {offsets = [9, 0], sizes = [1, 128], strides = [1, 1]} : vector<16x128xf32> to vector<1x128xf32>
    %c7 = arith.constant 7 : index
    %c0_22 = arith.constant 0 : index
    %61 = vector.load %arg11[%c7, %c0_22] : memref<32x128xf32, #tpu.memory_space<vmem>>, vector<16x128xf32>
    %62 = vector.broadcast %60 : vector<1x128xf32> to vector<16x128xf32>
    %63 = arith.mulf %62, %61 : vector<16x128xf32>
    %64 = arith.addf %59, %63 : vector<16x128xf32>
    %65 = vector.extract_strided_slice %13 {offsets = [10, 0], sizes = [1, 128], strides = [1, 1]} : vector<16x128xf32> to vector<1x128xf32>
    %c6 = arith.constant 6 : index
    %c0_23 = arith.constant 0 : index
    %66 = vector.load %arg11[%c6, %c0_23] : memref<32x128xf32, #tpu.memory_space<vmem>>, vector<16x128xf32>
    %67 = vector.broadcast %65 : vector<1x128xf32> to vector<16x128xf32>
    %68 = arith.mulf %67, %66 : vector<16x128xf32>
    %69 = arith.addf %64, %68 : vector<16x128xf32>
    %70 = vector.extract_strided_slice %13 {offsets = [11, 0], sizes = [1, 128], strides = [1, 1]} : vector<16x128xf32> to vector<1x128xf32>
    %c5 = arith.constant 5 : index
    %c0_24 = arith.constant 0 : index
    %71 = vector.load %arg11[%c5, %c0_24] : memref<32x128xf32, #tpu.memory_space<vmem>>, vector<16x128xf32>
    %72 = vector.broadcast %70 : vector<1x128xf32> to vector<16x128xf32>
    %73 = arith.mulf %72, %71 : vector<16x128xf32>
    %74 = arith.addf %69, %73 : vector<16x128xf32>
    %75 = vector.extract_strided_slice %13 {offsets = [12, 0], sizes = [1, 128], strides = [1, 1]} : vector<16x128xf32> to vector<1x128xf32>
    %c4 = arith.constant 4 : index
    %c0_25 = arith.constant 0 : index
    %76 = vector.load %arg11[%c4, %c0_25] : memref<32x128xf32, #tpu.memory_space<vmem>>, vector<16x128xf32>
    %77 = vector.broadcast %75 : vector<1x128xf32> to vector<16x128xf32>
    %78 = arith.mulf %77, %76 : vector<16x128xf32>
    %79 = arith.addf %74, %78 : vector<16x128xf32>
    %80 = vector.extract_strided_slice %13 {offsets = [13, 0], sizes = [1, 128], strides = [1, 1]} : vector<16x128xf32> to vector<1x128xf32>
    %c3 = arith.constant 3 : index
    %c0_26 = arith.constant 0 : index
    %81 = vector.load %arg11[%c3, %c0_26] : memref<32x128xf32, #tpu.memory_space<vmem>>, vector<16x128xf32>
    %82 = vector.broadcast %80 : vector<1x128xf32> to vector<16x128xf32>
    %83 = arith.mulf %82, %81 : vector<16x128xf32>
    %84 = arith.addf %79, %83 : vector<16x128xf32>
    %85 = vector.extract_strided_slice %13 {offsets = [14, 0], sizes = [1, 128], strides = [1, 1]} : vector<16x128xf32> to vector<1x128xf32>
    %c2 = arith.constant 2 : index
    %c0_27 = arith.constant 0 : index
    %86 = vector.load %arg11[%c2, %c0_27] : memref<32x128xf32, #tpu.memory_space<vmem>>, vector<16x128xf32>
    %87 = vector.broadcast %85 : vector<1x128xf32> to vector<16x128xf32>
    %88 = arith.mulf %87, %86 : vector<16x128xf32>
    %89 = arith.addf %84, %88 : vector<16x128xf32>
    %90 = vector.extract_strided_slice %13 {offsets = [15, 0], sizes = [1, 128], strides = [1, 1]} : vector<16x128xf32> to vector<1x128xf32>
    %c1 = arith.constant 1 : index
    %c0_28 = arith.constant 0 : index
    %91 = vector.load %arg11[%c1, %c0_28] : memref<32x128xf32, #tpu.memory_space<vmem>>, vector<16x128xf32>
    %92 = vector.broadcast %90 : vector<1x128xf32> to vector<16x128xf32>
    %93 = arith.mulf %92, %91 : vector<16x128xf32>
    %94 = arith.addf %89, %93 : vector<16x128xf32>
    %95 = arith.mulf %94, %12 : vector<16x128xf32>
    %c0_29 = arith.constant 0 : index
    %c0_30 = arith.constant 0 : index
    %96 = vector.load %arg7[%c0_29, %c0_30] : memref<16x128xf32, #tpu.memory_space<vmem>>, vector<16x128xf32>
    %c0_31 = arith.constant 0 : index
    %c0_32 = arith.constant 0 : index
    %97 = vector.load %arg9[%c0_31, %c0_32] : memref<1x128xf32, #tpu.memory_space<vmem>>, vector<1x128xf32>
    %c16_33 = arith.constant 16 : index
    %c0_34 = arith.constant 0 : index
    %98 = vector.load %arg11[%c16_33, %c0_34] : memref<32x128xf32, #tpu.memory_space<vmem>>, vector<16x128xf32>
    tpu.vector_store %arg11[%c16_33, %c0_34], %95 {strides = array<i32>} : memref<32x128xf32, #tpu.memory_space<vmem>>, vector<16x128xf32>,
    %99 = vector.extract_strided_slice %96 {offsets = [0, 0], sizes = [1, 128], strides = [1, 1]} : vector<16x128xf32> to vector<1x128xf32>
    %100 = arith.addf %97, %99 : vector<1x128xf32>
    %101 = vector.broadcast %100 : vector<1x128xf32> to vector<16x128xf32>
    %102 = arith.mulf %101, %95 : vector<16x128xf32>
    %103 = vector.extract_strided_slice %96 {offsets = [1, 0], sizes = [1, 128], strides = [1, 1]} : vector<16x128xf32> to vector<1x128xf32>
    %c15_35 = arith.constant 15 : index
    %c0_36 = arith.constant 0 : index
    %104 = vector.load %arg11[%c15_35, %c0_36] : memref<32x128xf32, #tpu.memory_space<vmem>>, vector<16x128xf32>
    %105 = vector.broadcast %103 : vector<1x128xf32> to vector<16x128xf32>
    %106 = arith.mulf %105, %104 : vector<16x128xf32>
    %107 = arith.addf %102, %106 : vector<16x128xf32>
    %108 = vector.extract_strided_slice %96 {offsets = [2, 0], sizes = [1, 128], strides = [1, 1]} : vector<16x128xf32> to vector<1x128xf32>
    %c14_37 = arith.constant 14 : index
    %c0_38 = arith.constant 0 : index
    %109 = vector.load %arg11[%c14_37, %c0_38] : memref<32x128xf32, #tpu.memory_space<vmem>>, vector<16x128xf32>
    %110 = vector.broadcast %108 : vector<1x128xf32> to vector<16x128xf32>
    %111 = arith.mulf %110, %109 : vector<16x128xf32>
    %112 = arith.addf %107, %111 : vector<16x128xf32>
    %113 = vector.extract_strided_slice %96 {offsets = [3, 0], sizes = [1, 128], strides = [1, 1]} : vector<16x128xf32> to vector<1x128xf32>
    %c13_39 = arith.constant 13 : index
    %c0_40 = arith.constant 0 : index
    %114 = vector.load %arg11[%c13_39, %c0_40] : memref<32x128xf32, #tpu.memory_space<vmem>>, vector<16x128xf32>
    %115 = vector.broadcast %113 : vector<1x128xf32> to vector<16x128xf32>
    %116 = arith.mulf %115, %114 : vector<16x128xf32>
    %117 = arith.addf %112, %116 : vector<16x128xf32>
    %118 = vector.extract_strided_slice %96 {offsets = [4, 0], sizes = [1, 128], strides = [1, 1]} : vector<16x128xf32> to vector<1x128xf32>
    %c12_41 = arith.constant 12 : index
    %c0_42 = arith.constant 0 : index
    %119 = vector.load %arg11[%c12_41, %c0_42] : memref<32x128xf32, #tpu.memory_space<vmem>>, vector<16x128xf32>
    %120 = vector.broadcast %118 : vector<1x128xf32> to vector<16x128xf32>
    %121 = arith.mulf %120, %119 : vector<16x128xf32>
    %122 = arith.addf %117, %121 : vector<16x128xf32>
    %123 = vector.extract_strided_slice %96 {offsets = [5, 0], sizes = [1, 128], strides = [1, 1]} : vector<16x128xf32> to vector<1x128xf32>
    %c11_43 = arith.constant 11 : index
    %c0_44 = arith.constant 0 : index
    %124 = vector.load %arg11[%c11_43, %c0_44] : memref<32x128xf32, #tpu.memory_space<vmem>>, vector<16x128xf32>
    %125 = vector.broadcast %123 : vector<1x128xf32> to vector<16x128xf32>
    %126 = arith.mulf %125, %124 : vector<16x128xf32>
    %127 = arith.addf %122, %126 : vector<16x128xf32>
    %128 = vector.extract_strided_slice %96 {offsets = [6, 0], sizes = [1, 128], strides = [1, 1]} : vector<16x128xf32> to vector<1x128xf32>
    %c10_45 = arith.constant 10 : index
    %c0_46 = arith.constant 0 : index
    %129 = vector.load %arg11[%c10_45, %c0_46] : memref<32x128xf32, #tpu.memory_space<vmem>>, vector<16x128xf32>
    %130 = vector.broadcast %128 : vector<1x128xf32> to vector<16x128xf32>
    %131 = arith.mulf %130, %129 : vector<16x128xf32>
    %132 = arith.addf %127, %131 : vector<16x128xf32>
    %133 = vector.extract_strided_slice %96 {offsets = [7, 0], sizes = [1, 128], strides = [1, 1]} : vector<16x128xf32> to vector<1x128xf32>
    %c9_47 = arith.constant 9 : index
    %c0_48 = arith.constant 0 : index
    %134 = vector.load %arg11[%c9_47, %c0_48] : memref<32x128xf32, #tpu.memory_space<vmem>>, vector<16x128xf32>
    %135 = vector.broadcast %133 : vector<1x128xf32> to vector<16x128xf32>
    %136 = arith.mulf %135, %134 : vector<16x128xf32>
    %137 = arith.addf %132, %136 : vector<16x128xf32>
    %138 = vector.extract_strided_slice %96 {offsets = [8, 0], sizes = [1, 128], strides = [1, 1]} : vector<16x128xf32> to vector<1x128xf32>
    %c8_49 = arith.constant 8 : index
    %c0_50 = arith.constant 0 : index
    %139 = vector.load %arg11[%c8_49, %c0_50] : memref<32x128xf32, #tpu.memory_space<vmem>>, vector<16x128xf32>
    %140 = vector.broadcast %138 : vector<1x128xf32> to vector<16x128xf32>
    %141 = arith.mulf %140, %139 : vector<16x128xf32>
    %142 = arith.addf %137, %141 : vector<16x128xf32>
    %143 = vector.extract_strided_slice %96 {offsets = [9, 0], sizes = [1, 128], strides = [1, 1]} : vector<16x128xf32> to vector<1x128xf32>
    %c7_51 = arith.constant 7 : index
    %c0_52 = arith.constant 0 : index
    %144 = vector.load %arg11[%c7_51, %c0_52] : memref<32x128xf32, #tpu.memory_space<vmem>>, vector<16x128xf32>
    %145 = vector.broadcast %143 : vector<1x128xf32> to vector<16x128xf32>
    %146 = arith.mulf %145, %144 : vector<16x128xf32>
    %147 = arith.addf %142, %146 : vector<16x128xf32>
    %148 = vector.extract_strided_slice %96 {offsets = [10, 0], sizes = [1, 128], strides = [1, 1]} : vector<16x128xf32> to vector<1x128xf32>
    %c6_53 = arith.constant 6 : index
    %c0_54 = arith.constant 0 : index
    %149 = vector.load %arg11[%c6_53, %c0_54] : memref<32x128xf32, #tpu.memory_space<vmem>>, vector<16x128xf32>
    %150 = vector.broadcast %148 : vector<1x128xf32> to vector<16x128xf32>
    %151 = arith.mulf %150, %149 : vector<16x128xf32>
    %152 = arith.addf %147, %151 : vector<16x128xf32>
    %153 = vector.extract_strided_slice %96 {offsets = [11, 0], sizes = [1, 128], strides = [1, 1]} : vector<16x128xf32> to vector<1x128xf32>
    %c5_55 = arith.constant 5 : index
    %c0_56 = arith.constant 0 : index
    %154 = vector.load %arg11[%c5_55, %c0_56] : memref<32x128xf32, #tpu.memory_space<vmem>>, vector<16x128xf32>
    %155 = vector.broadcast %153 : vector<1x128xf32> to vector<16x128xf32>
    %156 = arith.mulf %155, %154 : vector<16x128xf32>
    %157 = arith.addf %152, %156 : vector<16x128xf32>
    %158 = vector.extract_strided_slice %96 {offsets = [12, 0], sizes = [1, 128], strides = [1, 1]} : vector<16x128xf32> to vector<1x128xf32>
    %c4_57 = arith.constant 4 : index
    %c0_58 = arith.constant 0 : index
    %159 = vector.load %arg11[%c4_57, %c0_58] : memref<32x128xf32, #tpu.memory_space<vmem>>, vector<16x128xf32>
    %160 = vector.broadcast %158 : vector<1x128xf32> to vector<16x128xf32>
    %161 = arith.mulf %160, %159 : vector<16x128xf32>
    %162 = arith.addf %157, %161 : vector<16x128xf32>
    %163 = vector.extract_strided_slice %96 {offsets = [13, 0], sizes = [1, 128], strides = [1, 1]} : vector<16x128xf32> to vector<1x128xf32>
    %c3_59 = arith.constant 3 : index
    %c0_60 = arith.constant 0 : index
    %164 = vector.load %arg11[%c3_59, %c0_60] : memref<32x128xf32, #tpu.memory_space<vmem>>, vector<16x128xf32>
    %165 = vector.broadcast %163 : vector<1x128xf32> to vector<16x128xf32>
    %166 = arith.mulf %165, %164 : vector<16x128xf32>
    %167 = arith.addf %162, %166 : vector<16x128xf32>
    %168 = vector.extract_strided_slice %96 {offsets = [14, 0], sizes = [1, 128], strides = [1, 1]} : vector<16x128xf32> to vector<1x128xf32>
    %c2_61 = arith.constant 2 : index
    %c0_62 = arith.constant 0 : index
    %169 = vector.load %arg11[%c2_61, %c0_62] : memref<32x128xf32, #tpu.memory_space<vmem>>, vector<16x128xf32>
    %170 = vector.broadcast %168 : vector<1x128xf32> to vector<16x128xf32>
    %171 = arith.mulf %170, %169 : vector<16x128xf32>
    %172 = arith.addf %167, %171 : vector<16x128xf32>
    %173 = vector.extract_strided_slice %96 {offsets = [15, 0], sizes = [1, 128], strides = [1, 1]} : vector<16x128xf32> to vector<1x128xf32>
    %c1_63 = arith.constant 1 : index
    %c0_64 = arith.constant 0 : index
    %174 = vector.load %arg11[%c1_63, %c0_64] : memref<32x128xf32, #tpu.memory_space<vmem>>, vector<16x128xf32>
    %175 = vector.broadcast %173 : vector<1x128xf32> to vector<16x128xf32>
    %176 = arith.mulf %175, %174 : vector<16x128xf32>
    %177 = arith.addf %172, %176 : vector<16x128xf32>
    %178 = arith.mulf %177, %10 : vector<16x128xf32>
    %179 = arith.truncf %178 : vector<16x128xf32> to vector<16x128xbf16>
    %c0_65 = arith.constant 0 : index
    %c0_66 = arith.constant 0 : index
    %180 = vector.load %arg4[%c0_65, %c0_66] : memref<128x128xbf16, #tpu.memory_space<vmem>>, vector<128x128xbf16>
    %cst_67 = arith.constant dense<0.000000e+00> : vector<16x128xf32>
    %181 = tpu.matmul %179, %180, %cst_67 {dimension_numbers = #tpu.dot_dimension_numbers<[1], [0], [0], [1], [0, 0, 1, 1], [], []>} : vector<16x128xbf16>, vector<128x128xbf16>, vector<16x128xf32> -> vector<16x128xf32>
    %c0_68 = arith.constant 0 : index
    %c0_69 = arith.constant 0 : index
    %182 = vector.load %arg5[%c0_68, %c0_69] : memref<1x128xf32, #tpu.memory_space<vmem>>, vector<1x128xf32>
    %183 = vector.broadcast %182 : vector<1x128xf32> to vector<16x128xf32>
    %184 = arith.addf %181, %183 : vector<16x128xf32>
    %c0_70 = arith.constant 0 : index
    %c0_71 = arith.constant 0 : index
    %c0_72 = arith.constant 0 : index
    %185 = vector.load %arg10[%c0_70, %c0_71, %c0_72] : memref<1x16x128xf32, #tpu.memory_space<vmem>>, vector<1x16x128xf32>
    %186 = vector.shape_cast %185 : vector<1x16x128xf32> to vector<16x128xf32>
    %187 = vector.shape_cast %184 : vector<16x128xf32> to vector<1x16x128xf32>
    tpu.vector_store %arg10[%c0_70, %c0_71, %c0_72], %187 {strides = array<i32>} : memref<1x16x128xf32, #tpu.memory_space<vmem>>, vector<1x16x128xf32>,
    return
  }
  func.func @transform_0(%arg0: i32) -> (i32, i32, i32) {
    %c0_i32 = arith.constant 0 : i32
    %c0_i32_0 = arith.constant 0 : i32
    %c0_i32_1 = arith.constant 0 : i32
    return %arg0, %c0_i32, %c0_i32_0 : i32, i32, i32
  }
  func.func @transform_1(%arg0: i32) -> (i32, i32) {
    %c0_i32 = arith.constant 0 : i32
    %c0_i32_0 = arith.constant 0 : i32
    %c0_i32_1 = arith.constant 0 : i32
    return %c0_i32, %c0_i32_0 : i32, i32
  }
  func.func @transform_2(%arg0: i32) -> (i32, i32) {
    %c0_i32 = arith.constant 0 : i32
    %c0_i32_0 = arith.constant 0 : i32
    %c0_i32_1 = arith.constant 0 : i32
    return %c0_i32, %c0_i32_0 : i32, i32
  }
  func.func @transform_3(%arg0: i32) -> (i32, i32) {
    %c0_i32 = arith.constant 0 : i32
    %c0_i32_0 = arith.constant 0 : i32
    %c0_i32_1 = arith.constant 0 : i32
    return %c0_i32, %c0_i32_0 : i32, i32
  }
  func.func @transform_4(%arg0: i32) -> (i32, i32) {
    %c0_i32 = arith.constant 0 : i32
    %c0_i32_0 = arith.constant 0 : i32
    %c0_i32_1 = arith.constant 0 : i32
    return %c0_i32, %c0_i32_0 : i32, i32
  }
  func.func @transform_5(%arg0: i32) -> (i32, i32) {
    %c0_i32 = arith.constant 0 : i32
    %c0_i32_0 = arith.constant 0 : i32
    %c0_i32_1 = arith.constant 0 : i32
    return %c0_i32, %c0_i32_0 : i32, i32
  }
  func.func @transform_6(%arg0: i32) -> (i32, i32) {
    %c0_i32 = arith.constant 0 : i32
    %c0_i32_0 = arith.constant 0 : i32
    %c0_i32_1 = arith.constant 0 : i32
    return %c0_i32, %c0_i32_0 : i32, i32
  }
  func.func @transform_7(%arg0: i32) -> (i32, i32) {
    %c0_i32 = arith.constant 0 : i32
    %c0_i32_0 = arith.constant 0 : i32
    %c0_i32_1 = arith.constant 0 : i32
    return %c0_i32, %c0_i32_0 : i32, i32
  }
  func.func @transform_8(%arg0: i32) -> (i32, i32) {
    %c0_i32 = arith.constant 0 : i32
    %c0_i32_0 = arith.constant 0 : i32
    %c0_i32_1 = arith.constant 0 : i32
    return %c0_i32, %c0_i32_0 : i32, i32
  }
  func.func @transform_9(%arg0: i32) -> (i32, i32, i32) {
    %c0_i32 = arith.constant 0 : i32
    %c0_i32_0 = arith.constant 0 : i32
    %c0_i32_1 = arith.constant 0 : i32
    return %arg0, %c0_i32, %c0_i32_0 : i32, i32, i32
  }
}

</mosaic_0001>

<llo_original>
// kernel: h3_forward.1
$region0: #{h3_forward.1}
  #allocation0 [shape = 'u32[]', space=smem, size = 0x4, offset = 0x4, fixed_abs, tag = 'smem constant byte address 0x4 - core index']
  #allocation1 [shape = 'u32[144,128]{1,0:T(1,128)}', space=vmem, size = 0x12000, scoped, tag = 'internal scratch']
  #allocation2 [shape = 'f32[32,128]{1,0:T(8,128)}', space=vmem, size = 0x4000, scoped, tag = 'scratch operand']
  %s0 = inlined_call_operand.vmem [shape: f32[4,16,128], index: 0, kind: input, shape index: {}]
  %s1 = inlined_call_operand.vmem [shape: bf16[128,384], index: 1, kind: input, shape index: {}]
  %s2 = inlined_call_operand.vmem [shape: f32[1,384], index: 2, kind: input, shape index: {}]
  %s3 = inlined_call_operand.vmem [shape: bf16[128,128], index: 3, kind: input, shape index: {}]
  %s4 = inlined_call_operand.vmem [shape: f32[1,128], index: 4, kind: input, shape index: {}]
  %s5 = inlined_call_operand.vmem [shape: f32[16,128], index: 5, kind: input, shape index: {}]
  %s6 = inlined_call_operand.vmem [shape: f32[16,128], index: 6, kind: input, shape index: {}]
  %s7 = inlined_call_operand.vmem [shape: f32[1,128], index: 7, kind: input, shape index: {}]
  %s8 = inlined_call_operand.vmem [shape: f32[1,128], index: 8, kind: input, shape index: {}]
  %s9 = inlined_call_operand.hbm [shape: f32[4,16,128], index: 9, kind: output, shape index: {}]
  %s10 = sld [smem:[#allocation0]]
  $region69: #{h3_forward.1} parent=0
    _
  %s12 = ssub.s32 1, %s10
  %s13 = scalar_select 0, %s12, %s10
  $region1: #{h3_forward.1} parent=0
    #allocation3 [shape = 'u8[16384]{0}', space=vmem, size = 0x4000, scoped, tag = 'output window, operand 0']
    #allocation4 [shape = 's32[2]{0}', space=sflag, size = 0x8, scoped, tag = 'scoped memory for h3_forward.1']
    %14 = vsyncpa [#allocation4], 0
    %s15 = scalar_lea.sflag [#allocation4], 1
    %16 = vsyncpa %s15, 0
    loop: start=0, step=1, limit=6
    $region2: #{h3_forward.1} parent=1 // loop_pre_header
      _
    $region3: #{h3_forward.1} parent=1 // loop_header
      %s18 = sphi 0, %s22
      %p19 = scmp.ge.s32.totalorder %s18, 6
      %s28 = sphi 0, %s30
      %s31 = sphi 0, %s28
      %s32 = sphi 0, %s31
      %s48 = sphi 0, %s32
      %s52 = sphi 0, %s52
      %s54 = sphi 0, %s52
      %s55 = sphi 0, %s54
      %s69 = sphi 0, %s55
      %s73 = sphi 0, %s73
      %s75 = sphi 0, %s73
      %s76 = sphi 0, %s75
      %s90 = sphi 0, %s76
      %s94 = sphi 0, %s94
      %s96 = sphi 0, %s94
      %s97 = sphi 0, %s96
      %s111 = sphi 0, %s97
      %s115 = sphi 0, %s115
      %s117 = sphi 0, %s115
      %s118 = sphi 0, %s117
      %s132 = sphi 0, %s118
      %s136 = sphi 0, %s136
      %s138 = sphi 0, %s136
      %s139 = sphi 0, %s138
      %s153 = sphi 0, %s139
      %s157 = sphi 0, %s157
      %s159 = sphi 0, %s157
      %s160 = sphi 0, %s159
      %s174 = sphi 0, %s160
      %s178 = sphi 0, %s178
      %s180 = sphi 0, %s178
      %s181 = sphi 0, %s180
      %s195 = sphi 0, %s181
      %s199 = sphi 0, %s199
      %s201 = sphi 0, %s199
      %s202 = sphi 0, %s201
      %s216 = sphi 0, %s202
      %s222 = sphi 0, %s224
      %s225 = sphi 0, %s222
      %s226 = sphi 0, %s225
      %s242 = sphi 0, %s226
    $region4: #{h3_forward.1} parent=1 // loop_header_branch
      %21 = sbr.rel (%p19) target = $region8
    $region5: #{h3_forward.1} parent=1 // loop_body
      %s23 = ssub.s32 %s18, 1
      %s24 = ssub.s32 %s18, 2
      %s25 = sadd.s32 %s18, 1
      %s26 = ssub.s32 %s18, %s25
      %p27 = scmp.eq.s32.totalorder %s26, 0
      %s29 = sadd.s32 %s28, 1
      %s30 = scalar_select %p27, %s28, %s29
      %p33 = pneg %p27
      %p34 = scmp.eq.s32.totalorder %s18, 3
      %p35 = por %p33, %p34
      %p36 = scmp.ne.s32.totalorder %s28, %s31
      %p37 = scmp.eq.s32.totalorder %s18, 0
      %p38 = por %p36, %p37
      %p39 = scmp.ne.s32.totalorder %s28, %s31
      %p40 = scmp.eq.s32.totalorder %s23, 3
      %p41 = por %p39, %p40
      %p42 = scmp.ne.s32.totalorder %s31, %s32
      %p43 = scmp.eq.s32.totalorder %s23, 0
      %p44 = por %p42, %p43
      %p45 = scmp.ne.s32.totalorder %s31, %s32
      %p46 = scmp.eq.s32.totalorder %s24, 3
      %p47 = por %p45, %p46
      %p49 = scmp.ne.s32.totalorder %s32, %s48
      %p50 = scmp.eq.s32.totalorder %s24, 0
      %p51 = por %p49, %p50
      %s53 = sadd.s32 %s52, 1
      %p56 = scmp.eq.s32.totalorder %s18, 3
      %p57 = scmp.ne.s32.totalorder %s52, %s54
      %p58 = scmp.eq.s32.totalorder %s18, 0
      %p59 = por %p57, %p58
      %p60 = scmp.ne.s32.totalorder %s52, %s54
      %p61 = scmp.eq.s32.totalorder %s23, 3
      %p62 = por %p60, %p61
      %p63 = scmp.ne.s32.totalorder %s54, %s55
      %p64 = scmp.eq.s32.totalorder %s23, 0
      %p65 = por %p63, %p64
      %p66 = scmp.ne.s32.totalorder %s54, %s55
      %p67 = scmp.eq.s32.totalorder %s24, 3
      %p68 = por %p66, %p67
      %p70 = scmp.ne.s32.totalorder %s55, %s69
      %p71 = scmp.eq.s32.totalorder %s24, 0
      %p72 = por %p70, %p71
      %s74 = sadd.s32 %s73, 1
      %p77 = scmp.eq.s32.totalorder %s18, 3
      %p78 = scmp.ne.s32.totalorder %s73, %s75
      %p79 = scmp.eq.s32.totalorder %s18, 0
      %p80 = por %p78, %p79
      %p81 = scmp.ne.s32.totalorder %s73, %s75
      %p82 = scmp.eq.s32.totalorder %s23, 3
      %p83 = por %p81, %p82
      %p84 = scmp.ne.s32.totalorder %s75, %s76
      %p85 = scmp.eq.s32.totalorder %s23, 0
      %p86 = por %p84, %p85
      %p87 = scmp.ne.s32.totalorder %s75, %s76
      %p88 = scmp.eq.s32.totalorder %s24, 3
      %p89 = por %p87, %p88
      %p91 = scmp.ne.s32.totalorder %s76, %s90
      %p92 = scmp.eq.s32.totalorder %s24, 0
      %p93 = por %p91, %p92
      %s95 = sadd.s32 %s94, 1
      %p98 = scmp.eq.s32.totalorder %s18, 3
      %p99 = scmp.ne.s32.totalorder %s94, %s96
      %p100 = scmp.eq.s32.totalorder %s18, 0
      %p101 = por %p99, %p100
      %p102 = scmp.ne.s32.totalorder %s94, %s96
      %p103 = scmp.eq.s32.totalorder %s23, 3
      %p104 = por %p102, %p103
      %p105 = scmp.ne.s32.totalorder %s96, %s97
      %p106 = scmp.eq.s32.totalorder %s23, 0
      %p107 = por %p105, %p106
      %p108 = scmp.ne.s32.totalorder %s96, %s97
      %p109 = scmp.eq.s32.totalorder %s24, 3
      %p110 = por %p108, %p109
      %p112 = scmp.ne.s32.totalorder %s97, %s111
      %p113 = scmp.eq.s32.totalorder %s24, 0
      %p114 = por %p112, %p113
      %s116 = sadd.s32 %s115, 1
      %p119 = scmp.eq.s32.totalorder %s18, 3
      %p120 = scmp.ne.s32.totalorder %s115, %s117
      %p121 = scmp.eq.s32.totalorder %s18, 0
      %p122 = por %p120, %p121
      %p123 = scmp.ne.s32.totalorder %s115, %s117
      %p124 = scmp.eq.s32.totalorder %s23, 3
      %p125 = por %p123, %p124
      %p126 = scmp.ne.s32.totalorder %s117, %s118
      %p127 = scmp.eq.s32.totalorder %s23, 0
      %p128 = por %p126, %p127
      %p129 = scmp.ne.s32.totalorder %s117, %s118
      %p130 = scmp.eq.s32.totalorder %s24, 3
      %p131 = por %p129, %p130
      %p133 = scmp.ne.s32.totalorder %s118, %s132
      %p134 = scmp.eq.s32.totalorder %s24, 0
      %p135 = por %p133, %p134
      %s137 = sadd.s32 %s136, 1
      %p140 = scmp.eq.s32.totalorder %s18, 3
      %p141 = scmp.ne.s32.totalorder %s136, %s138
      %p142 = scmp.eq.s32.totalorder %s18, 0
      %p143 = por %p141, %p142
      %p144 = scmp.ne.s32.totalorder %s136, %s138
      %p145 = scmp.eq.s32.totalorder %s23, 3
      %p146 = por %p144, %p145
      %p147 = scmp.ne.s32.totalorder %s138, %s139
      %p148 = scmp.eq.s32.totalorder %s23, 0
      %p149 = por %p147, %p148
      %p150 = scmp.ne.s32.totalorder %s138, %s139
      %p151 = scmp.eq.s32.totalorder %s24, 3
      %p152 = por %p150, %p151
      %p154 = scmp.ne.s32.totalorder %s139, %s153
      %p155 = scmp.eq.s32.totalorder %s24, 0
      %p156 = por %p154, %p155
      %s158 = sadd.s32 %s157, 1
      %p161 = scmp.eq.s32.totalorder %s18, 3
      %p162 = scmp.ne.s32.totalorder %s157, %s159
      %p163 = scmp.eq.s32.totalorder %s18, 0
      %p164 = por %p162, %p163
      %p165 = scmp.ne.s32.totalorder %s157, %s159
      %p166 = scmp.eq.s32.totalorder %s23, 3
      %p167 = por %p165, %p166
      %p168 = scmp.ne.s32.totalorder %s159, %s160
      %p169 = scmp.eq.s32.totalorder %s23, 0
      %p170 = por %p168, %p169
      %p171 = scmp.ne.s32.totalorder %s159, %s160
      %p172 = scmp.eq.s32.totalorder %s24, 3
      %p173 = por %p171, %p172
      %p175 = scmp.ne.s32.totalorder %s160, %s174
      %p176 = scmp.eq.s32.totalorder %s24, 0
      %p177 = por %p175, %p176
      %s179 = sadd.s32 %s178, 1
      %p182 = scmp.eq.s32.totalorder %s18, 3
      %p183 = scmp.ne.s32.totalorder %s178, %s180
      %p184 = scmp.eq.s32.totalorder %s18, 0
      %p185 = por %p183, %p184
      %p186 = scmp.ne.s32.totalorder %s178, %s180
      %p187 = scmp.eq.s32.totalorder %s23, 3
      %p188 = por %p186, %p187
      %p189 = scmp.ne.s32.totalorder %s180, %s181
      %p190 = scmp.eq.s32.totalorder %s23, 0
      %p191 = por %p189, %p190
      %p192 = scmp.ne.s32.totalorder %s180, %s181
      %p193 = scmp.eq.s32.totalorder %s24, 3
      %p194 = por %p192, %p193
      %p196 = scmp.ne.s32.totalorder %s181, %s195
      %p197 = scmp.eq.s32.totalorder %s24, 0
      %p198 = por %p196, %p197
      %s200 = sadd.s32 %s199, 1
      %p203 = scmp.eq.s32.totalorder %s18, 3
      %p204 = scmp.ne.s32.totalorder %s199, %s201
      %p205 = scmp.eq.s32.totalorder %s18, 0
      %p206 = por %p204, %p205
      %p207 = scmp.ne.s32.totalorder %s199, %s201
      %p208 = scmp.eq.s32.totalorder %s23, 3
      %p209 = por %p207, %p208
      %p210 = scmp.ne.s32.totalorder %s201, %s202
      %p211 = scmp.eq.s32.totalorder %s23, 0
      %p212 = por %p210, %p211
      %p213 = scmp.ne.s32.totalorder %s201, %s202
      %p214 = scmp.eq.s32.totalorder %s24, 3
      %p215 = por %p213, %p214
      %p217 = scmp.ne.s32.totalorder %s202, %s216
      %p218 = scmp.eq.s32.totalorder %s24, 0
      %p219 = por %p217, %p218
      %s220 = ssub.s32 %s18, %s25
      %p221 = scmp.eq.s32.totalorder %s220, 0
      %s223 = sadd.s32 %s222, 1
      %s224 = scalar_select %p221, %s222, %s223
      %p227 = pneg %p221
      %p228 = scmp.eq.s32.totalorder %s18, 3
      %p229 = por %p227, %p228
      %p230 = scmp.ne.s32.totalorder %s222, %s225
      %p231 = scmp.eq.s32.totalorder %s18, 0
      %p232 = por %p230, %p231
      %p233 = scmp.ne.s32.totalorder %s222, %s225
      %p234 = scmp.eq.s32.totalorder %s23, 3
      %p235 = por %p233, %p234
      %p236 = scmp.ne.s32.totalorder %s225, %s226
      %p237 = scmp.eq.s32.totalorder %s23, 0
      %p238 = por %p236, %p237
      %p239 = scmp.ne.s32.totalorder %s225, %s226
      %p240 = scmp.eq.s32.totalorder %s24, 3
      %p241 = por %p239, %p240
      %p243 = scmp.ne.s32.totalorder %s226, %s242
      %p244 = scmp.eq.s32.totalorder %s24, 0
      %p245 = por %p243, %p244
      %p246 = scmp.le.s32.totalorder 1, %s18
      %p247 = scmp.lt.s32.totalorder %s18, 5
      %p248 = pnand %p246, %p247
      %p249 = pneg %p248
      // Predicated region
      $region9: #{h3_forward.1} parent=5 // pred_check
        _
      $region10: #{h3_forward.1} parent=5 // pred_check_branch
        %251 = sbr.rel (%p248) target = $region12
      $region11: #{h3_forward.1} parent=5 // pred_region
        %s252 = ssub.s32 %s18, 1
        // Predicated region
        $region13: #{h3_forward.1} parent=11 // pred_check
          %p253 = pneg %p65
        $region14: #{h3_forward.1} parent=11 // pred_check_branch
          %255 = sbr.rel (%p253) target = $region16
        $region15: #{h3_forward.1} parent=11 // pred_region
          _
        $region16: #{h3_forward.1} parent=11 // pred_fallthru
          _
        // Predicated region
        $region17: #{h3_forward.1} parent=11 // pred_check
          %p256 = pneg %p86
        $region18: #{h3_forward.1} parent=11 // pred_check_branch
          %258 = sbr.rel (%p256) target = $region20
        $region19: #{h3_forward.1} parent=11 // pred_region
          _
        $region20: #{h3_forward.1} parent=11 // pred_fallthru
          _
        // Predicated region
        $region21: #{h3_forward.1} parent=11 // pred_check
          %p259 = pneg %p107
        $region22: #{h3_forward.1} parent=11 // pred_check_branch
          %261 = sbr.rel (%p259) target = $region24
        $region23: #{h3_forward.1} parent=11 // pred_region
          _
        $region24: #{h3_forward.1} parent=11 // pred_fallthru
          _
        // Predicated region
        $region25: #{h3_forward.1} parent=11 // pred_check
          %p262 = pneg %p128
        $region26: #{h3_forward.1} parent=11 // pred_check_branch
          %264 = sbr.rel (%p262) target = $region28
        $region27: #{h3_forward.1} parent=11 // pred_region
          _
        $region28: #{h3_forward.1} parent=11 // pred_fallthru
          _
        // Predicated region
        $region29: #{h3_forward.1} parent=11 // pred_check
          %p265 = pneg %p149
        $region30: #{h3_forward.1} parent=11 // pred_check_branch
          %267 = sbr.rel (%p265) target = $region32
        $region31: #{h3_forward.1} parent=11 // pred_region
          _
        $region32: #{h3_forward.1} parent=11 // pred_fallthru
          _
        // Predicated region
        $region33: #{h3_forward.1} parent=11 // pred_check
          %p268 = pneg %p170
        $region34: #{h3_forward.1} parent=11 // pred_check_branch
          %270 = sbr.rel (%p268) target = $region36
        $region35: #{h3_forward.1} parent=11 // pred_region
          _
        $region36: #{h3_forward.1} parent=11 // pred_fallthru
          _
        // Predicated region
        $region37: #{h3_forward.1} parent=11 // pred_check
          %p271 = pneg %p191
        $region38: #{h3_forward.1} parent=11 // pred_check_branch
          %273 = sbr.rel (%p271) target = $region40
        $region39: #{h3_forward.1} parent=11 // pred_region
          _
        $region40: #{h3_forward.1} parent=11 // pred_fallthru
          _
        // Predicated region
        $region41: #{h3_forward.1} parent=11 // pred_check
          %p274 = pneg %p212
        $region42: #{h3_forward.1} parent=11 // pred_check_branch
          %276 = sbr.rel (%p274) target = $region44
        $region43: #{h3_forward.1} parent=11 // pred_region
          _
        $region44: #{h3_forward.1} parent=11 // pred_fallthru
          _
      $region12: #{h3_forward.1} parent=5 // pred_fallthru
        _
      %p277 = scmp.lt.s32.totalorder %s18, 4
      // Predicated region
      $region45: #{h3_forward.1} parent=5 // pred_check
        %p278 = pneg %p277
      $region46: #{h3_forward.1} parent=5 // pred_check_branch
        %280 = sbr.rel (%p278) target = $region48
      $region47: #{h3_forward.1} parent=5 // pred_region
        // Predicated region
        $region49: #{h3_forward.1} parent=47 // pred_check
          %p281 = pneg %p38
        $region50: #{h3_forward.1} parent=47 // pred_check_branch
          %283 = sbr.rel (%p281) target = $region52
        $region51: #{h3_forward.1} parent=47 // pred_region
          %p284 = scmp.lt.s32.totalorder %s18, 3
          %s285 = scalar_select %p284, %s18, 3
          %s286 = smul.addr %s285, 2
          %s287 = smul.addr %s286, 8
          %s288 = scalar_lea.vmem %s0, %s287
        $region52: #{h3_forward.1} parent=47 // pred_fallthru
          _
      $region48: #{h3_forward.1} parent=5 // pred_fallthru
        _
      %p289 = scmp.le.s32.totalorder 1, %s18
      %p290 = scmp.lt.s32.totalorder %s18, 5
      %p291 = pnand %p289, %p290
      %p292 = pneg %p291
      // Predicated region
      $region53: #{h3_forward.1} parent=5 // pred_check
        _
      $region54: #{h3_forward.1} parent=5 // pred_check_branch
        %294 = sbr.rel (%p291) target = $region56
      $region55: #{h3_forward.1} parent=5 // pred_region
        %s295 = ssub.s32 %s18, 1
        %p296 = scmp.lt.s32.totalorder %s23, 3
        %s297 = scalar_select %p296, %s23, 3
        %s298 = smul.addr %s297, 2
        %s299 = smul.addr %s298, 8
        %s300 = scalar_lea.vmem %s0, %s299
        %p301 = pneg %p44
        %p302 = pneg %p41
        %p303 = pneg %p65
        %p304 = pneg %p62
        %p305 = pneg %p86
        %p306 = pneg %p83
        %p307 = pneg %p107
        %p308 = pneg %p104
        %p309 = pneg %p128
        %p310 = pneg %p125
        %p311 = pneg %p149
        %p312 = pneg %p146
        %p313 = pneg %p170
        %p314 = pneg %p167
        %p315 = pneg %p191
        %p316 = pneg %p188
        %p317 = pneg %p212
        %p318 = pneg %p209
        %p319 = pneg %p238
        %p320 = pneg %p235
        %s321 = sand.u32 %s225, 1
        %s322 = scalar_lea.sflag [#allocation4], %s321
        %s323 = sand.u32 %s225, 1
        %s324 = smul.addr %s323, 16
        %s325 = scalar_lea.vmem [#allocation3], %s324
        %p326 = scmp.lt.s32.totalorder %s23, 3
        %s327 = scalar_select %p326, %s23, 3
        %s328 = smul.addr %s327, 2
        %s329 = smul.addr %s328, 8
        %s330 = scalar_lea.vmem %s0, %s329
        %332 = vst [vmem:[#allocation2] sm:$0xff] 0.0
        %333 = vst [vmem:[#allocation2 + $0x8] sm:$0xff] 0.0
        %v334 = vld [vmem:[%s330] sm:$0xff]
        %v335 = vld [vmem:[%s330 + $0x8] sm:$0xff]
        %v336 = vpack.c.bf16 %v335, %v334
        %v337 = vld [vmem:[%s1] sm:$0xff]
        %v338 = vld [vmem:[%s1 + $0x8] sm:$0xf]
        %v339 = vld [vmem:[%s1 + $0xc] sm:$0xff]
        %v340 = vld [vmem:[%s1 + $0x14] sm:$0xf]
        %v341 = vld [vmem:[%s1 + $0x18] sm:$0xff]
        %v342 = vld [vmem:[%s1 + $0x20] sm:$0xf]
        %v343 = vld [vmem:[%s1 + $0x24] sm:$0xff]
        %v344 = vld [vmem:[%s1 + $0x2c] sm:$0xf]
        %v345 = vld [vmem:[%s1 + $0x30] sm:$0xff]
        %v346 = vld [vmem:[%s1 + $0x38] sm:$0xf]
        %v347 = vld [vmem:[%s1 + $0x3c] sm:$0xff]
        %v348 = vld [vmem:[%s1 + $0x44] sm:$0xf]
        %v349 = vld [vmem:[%s1 + $0x48] sm:$0xff]
        %v350 = vld [vmem:[%s1 + $0x50] sm:$0xf]
        %v351 = vld [vmem:[%s1 + $0x54] sm:$0xff]
        %v352 = vld [vmem:[%s1 + $0x5c] sm:$0xf]
        %v353 = vld [vmem:[%s1 + $0x60] sm:$0xff]
        %v354 = vld [vmem:[%s1 + $0x68] sm:$0xf]
        %v355 = vld [vmem:[%s1 + $0x6c] sm:$0xff]
        %v356 = vld [vmem:[%s1 + $0x74] sm:$0xf]
        %v357 = vld [vmem:[%s1 + $0x78] sm:$0xff]
        %v358 = vld [vmem:[%s1 + $0x80] sm:$0xf]
        %v359 = vld [vmem:[%s1 + $0x84] sm:$0xff]
        %v360 = vld [vmem:[%s1 + $0x8c] sm:$0xf]
        %v361 = vld [vmem:[%s1 + $0x90] sm:$0xff]
        %v362 = vld [vmem:[%s1 + $0x98] sm:$0xf]
        %v363 = vld [vmem:[%s1 + $0x9c] sm:$0xff]
        %v364 = vld [vmem:[%s1 + $0xa4] sm:$0xf]
        %v365 = vld [vmem:[%s1 + $0xa8] sm:$0xff]
        %v366 = vld [vmem:[%s1 + $0xb0] sm:$0xf]
        %v367 = vld [vmem:[%s1 + $0xb4] sm:$0xff]
        %v368 = vld [vmem:[%s1 + $0xbc] sm:$0xf]
        %v369 = vld [vmem:[%s2] sm:$0x7]
        %v371 = vlaneseq
        %v372 = vshrl.u32 %v371, 7
        %v373 = vsub.s32 0, %v372
        %v374 = vrot.slane %v369, %v373
        %v375 = vlaneseq
        %v376 = vshrl.u32 %v375, 7
        %v377 = vsub.s32 1, %v376
        %v378 = vrot.slane %v369, %v377
        %v379 = vlaneseq
        %v380 = vshrl.u32 %v379, 7
        %v381 = vsub.s32 2, %v380
        %v382 = vrot.slane %v369, %v381
        %v418 = vunpack.c.l.b16 %v337
        %v419 = vunpack.c.h.b16 %v337
        %v420 = vunpack.c.l.b16 %v338
        %v421 = vunpack.c.l.b16 %v339
        %v422 = vunpack.c.h.b16 %v339
        %v423 = vunpack.c.l.b16 %v340
        %v424 = vunpack.c.l.b16 %v341
        %v425 = vunpack.c.h.b16 %v341
        %v426 = vunpack.c.l.b16 %v342
        %v427 = vunpack.c.l.b16 %v343
        %v428 = vunpack.c.h.b16 %v343
        %v429 = vunpack.c.l.b16 %v344
        %v430 = vunpack.c.l.b16 %v345
        %v431 = vunpack.c.h.b16 %v345
        %v432 = vunpack.c.l.b16 %v346
        %v433 = vunpack.c.l.b16 %v347
        %v434 = vunpack.c.h.b16 %v347
        %v435 = vunpack.c.l.b16 %v348
        %v436 = vunpack.c.l.b16 %v349
        %v437 = vunpack.c.h.b16 %v349
        %v438 = vunpack.c.l.b16 %v350
        %v439 = vunpack.c.l.b16 %v351
        %v440 = vunpack.c.h.b16 %v351
        %v441 = vunpack.c.l.b16 %v352
        %v442 = vunpack.c.l.b16 %v353
        %v443 = vunpack.c.h.b16 %v353
        %v444 = vunpack.c.l.b16 %v354
        %v445 = vunpack.c.l.b16 %v355
        %v446 = vunpack.c.h.b16 %v355
        %v447 = vunpack.c.l.b16 %v356
        %v448 = vunpack.c.l.b16 %v357
        %v449 = vunpack.c.h.b16 %v357
        %v450 = vunpack.c.l.b16 %v358
        %v451 = vunpack.c.l.b16 %v359
        %v452 = vunpack.c.h.b16 %v359
        %v453 = vunpack.c.l.b16 %v360
        %v454 = vunpack.c.l.b16 %v361
        %v455 = vunpack.c.h.b16 %v361
        %v456 = vunpack.c.l.b16 %v362
        %v457 = vunpack.c.l.b16 %v363
        %v458 = vunpack.c.h.b16 %v363
        %v459 = vunpack.c.l.b16 %v364
        %v460 = vunpack.c.l.b16 %v365
        %v461 = vunpack.c.h.b16 %v365
        %v462 = vunpack.c.l.b16 %v366
        %v463 = vunpack.c.l.b16 %v367
        %v464 = vunpack.c.h.b16 %v367
        %v465 = vunpack.c.l.b16 %v368
        %v466 = vpack.c.b16 %v421, %v418
        %v467 = vpack.c.b16 %v422, %v419
        %v468 = vpack.c.b16 %v423, %v420
        %v469 = vpack.c.b16 %v427, %v424
        %v470 = vpack.c.b16 %v428, %v425
        %v471 = vpack.c.b16 %v429, %v426
        %v472 = vpack.c.b16 %v433, %v430
        %v473 = vpack.c.b16 %v434, %v431
        %v474 = vpack.c.b16 %v435, %v432
        %v475 = vpack.c.b16 %v439, %v436
        %v476 = vpack.c.b16 %v440, %v437
        %v477 = vpack.c.b16 %v441, %v438
        %v478 = vpack.c.b16 %v445, %v442
        %v479 = vpack.c.b16 %v446, %v443
        %v480 = vpack.c.b16 %v447, %v444
        %v481 = vpack.c.b16 %v451, %v448
        %v482 = vpack.c.b16 %v452, %v449
        %v483 = vpack.c.b16 %v453, %v450
        %v484 = vpack.c.b16 %v457, %v454
        %v485 = vpack.c.b16 %v458, %v455
        %v486 = vpack.c.b16 %v459, %v456
        %v487 = vpack.c.b16 %v463, %v460
        %v488 = vpack.c.b16 %v464, %v461
        %v489 = vpack.c.b16 %v465, %v462
        %514 = vmatprep.subr.bf16.mxu0 %v467
        %515 = vmatpush1.bf16.msra.mxu0 %v466
        %516 = vmatprep.subr.bf16.mxu0 %v470
        %517 = vmatpush1.bf16.msra.mxu0 %v469
        %518 = vmatprep.subr.bf16.mxu0 %v473
        %519 = vmatpush1.bf16.msra.mxu0 %v472
        %520 = vmatprep.subr.bf16.mxu0 %v476
        %521 = vmatpush1.bf16.msra.mxu0 %v475
        %522 = vmatprep.subr.bf16.mxu0 %v479
        %523 = vmatpush1.bf16.msra.mxu0 %v478
        %524 = vmatprep.subr.bf16.mxu0 %v482
        %525 = vmatpush1.bf16.msra.mxu0 %v481
        %526 = vmatprep.subr.bf16.mxu0 %v485
        %527 = vmatpush1.bf16.msra.mxu0 %v484
        %528 = vmatprep.subr.bf16.mxu0 %v488
        %529 = vmatpush1.bf16.msra.mxu0 %v487
        %530 = vmatprep.subr.bf16.mxu0 0
        %531 = vmatpush1.bf16.msra.mxu0 0
        %532 = vmatprep.subr.bf16.mxu0 0
        %533 = vmatpush1.bf16.msra.mxu0 0
        %534 = vmatprep.subr.bf16.mxu0 0
        %535 = vmatpush1.bf16.msra.mxu0 0
        %536 = vmatprep.subr.bf16.mxu0 0
        %537 = vmatpush1.bf16.msra.mxu0 0
        %538 = vmatprep.subr.bf16.mxu0 0
        %539 = vmatpush1.bf16.msra.mxu0 0
        %540 = vmatprep.subr.bf16.mxu0 0
        %541 = vmatpush1.bf16.msra.mxu0 0
        %542 = vmatprep.subr.bf16.mxu0 0
        %543 = vmatpush1.bf16.msra.mxu0 0
        %544 = vmatprep.subr.bf16.mxu0 0
        %545 = vmatpush1.bf16.msra.mxu0 0
        %546 = vmatprep.mubr.bf16.mxu0 0
        %547 = vmatmul.mubr.bf16.gmra.mrb[0].mxu0 %v336
        %v548 = vpop.f32.mrb[0].mxu0
        %v549 = vadd.f32 %v374, %v548
        %v550 = vpop.f32.mrb[0].mxu0
        %v551 = vadd.f32 %v378, %v550
        %v552 = vpop.f32.mrb[0].mxu0
        %v553 = vadd.f32 %v374, %v552
        %v554 = vpop.f32.mrb[0].mxu0
        %v555 = vadd.f32 %v378, %v554
        %556 = vdwg.mxu0
        %557 = vmatprep.subr.bf16.mxu0 0
        %558 = vmatpush1.bf16.msra.mxu0 %v468
        %559 = vmatprep.subr.bf16.mxu0 0
        %560 = vmatpush1.bf16.msra.mxu0 %v471
        %561 = vmatprep.subr.bf16.mxu0 0
        %562 = vmatpush1.bf16.msra.mxu0 %v474
        %563 = vmatprep.subr.bf16.mxu0 0
        %564 = vmatpush1.bf16.msra.mxu0 %v477
        %565 = vmatprep.subr.bf16.mxu0 0
        %566 = vmatpush1.bf16.msra.mxu0 %v480
        %567 = vmatprep.subr.bf16.mxu0 0
        %568 = vmatpush1.bf16.msra.mxu0 %v483
        %569 = vmatprep.subr.bf16.mxu0 0
        %570 = vmatpush1.bf16.msra.mxu0 %v486
        %571 = vmatprep.subr.bf16.mxu0 0
        %572 = vmatpush1.bf16.msra.mxu0 %v489
        %573 = vmatprep.subr.bf16.mxu0 0
        %574 = vmatpush1.bf16.msra.mxu0 0
        %575 = vmatprep.subr.bf16.mxu0 0
        %576 = vmatpush1.bf16.msra.mxu0 0
        %577 = vmatprep.subr.bf16.mxu0 0
        %578 = vmatpush1.bf16.msra.mxu0 0
        %579 = vmatprep.subr.bf16.mxu0 0
        %580 = vmatpush1.bf16.msra.mxu0 0
        %581 = vmatprep.subr.bf16.mxu0 0
        %582 = vmatpush1.bf16.msra.mxu0 0
        %583 = vmatprep.subr.bf16.mxu0 0
        %584 = vmatpush1.bf16.msra.mxu0 0
        %585 = vmatprep.subr.bf16.mxu0 0
        %586 = vmatpush1.bf16.msra.mxu0 0
        %587 = vmatprep.subr.bf16.mxu0 0
        %588 = vmatpush1.bf16.msra.mxu0 0
        %589 = vmatprep.mubr.bf16.mxu0 0
        %590 = vmatmul.mubr.bf16.gmra.mrb[0].mxu0 %v336
        %v591 = vpop.f32.mrb[0].mxu0
        %v592 = vadd.f32 %v382, %v591
        %v593 = vpop.f32.mrb[0].mxu0
        %v594 = vpop.f32.mrb[0].mxu0
        %v595 = vadd.f32 %v382, %v594
        %v596 = vpop.f32.mrb[0].mxu0
        %597 = vdwg.mxu0
        %v598 = vld [vmem:[%s5] sm:$0xff]
        %v599 = vld [vmem:[%s5 + $0x8] sm:$0xff]
        %v600 = vld [vmem:[%s7] sm:$0x1]
        %601 = vst [vmem:[#allocation2 + $0x10] sm:$0xff] %v551
        %602 = vst [vmem:[#allocation2 + $0x18] sm:$0xff] %v555
        %v603 = vadd.f32 %v600, %v598
        %v605 = vlaneseq
        %v606 = vshrl.u32 %v605, 7
        %v607 = vsub.s32 0, %v606
        %v608 = vrot.slane %v603, %v607
        %v610 = vmul.f32 %v608, %v551
        %v611 = vmul.f32 %v608, %v555
        %v612 = vld [vmem:[#allocation2 + $0xf] sm:$0xff]
        %v613 = vld [vmem:[#allocation2 + $0x17] sm:$0xff]
        %v614 = vlaneseq
        %v615 = vshrl.u32 %v614, 7
        %v616 = vsub.s32 1, %v615
        %v617 = vrot.slane %v598, %v616
        %v618 = vmul.f32 %v617, %v612
        %v619 = vmul.f32 %v617, %v613
        %v620 = vadd.f32 %v610, %v618
        %v621 = vadd.f32 %v611, %v619
        %v622 = vld [vmem:[#allocation2 + $0xe] sm:$0xff]
        %v623 = vld [vmem:[#allocation2 + $0x16] sm:$0xff]
        %v624 = vlaneseq
        %v625 = vshrl.u32 %v624, 7
        %v626 = vsub.s32 2, %v625
        %v627 = vrot.slane %v598, %v626
        %v628 = vmul.f32 %v627, %v622
        %v629 = vmul.f32 %v627, %v623
        %v630 = vadd.f32 %v620, %v628
        %v631 = vadd.f32 %v621, %v629
        %v632 = vld [vmem:[#allocation2 + $0xd] sm:$0xff]
        %v633 = vld [vmem:[#allocation2 + $0x15] sm:$0xff]
        %v634 = vlaneseq
        %v635 = vshrl.u32 %v634, 7
        %v636 = vsub.s32 3, %v635
        %v637 = vrot.slane %v598, %v636
        %v638 = vmul.f32 %v637, %v632
        %v639 = vmul.f32 %v637, %v633
        %v640 = vadd.f32 %v630, %v638
        %v641 = vadd.f32 %v631, %v639
        %v642 = vld [vmem:[#allocation2 + $0xc] sm:$0xff]
        %v643 = vld [vmem:[#allocation2 + $0x14] sm:$0xff]
        %v644 = vlaneseq
        %v645 = vshrl.u32 %v644, 7
        %v646 = vsub.s32 4, %v645
        %v647 = vrot.slane %v598, %v646
        %v648 = vmul.f32 %v647, %v642
        %v649 = vmul.f32 %v647, %v643
        %v650 = vadd.f32 %v640, %v648
        %v651 = vadd.f32 %v641, %v649
        %v652 = vld [vmem:[#allocation2 + $0xb] sm:$0xff]
        %v653 = vld [vmem:[#allocation2 + $0x13] sm:$0xff]
        %v654 = vlaneseq
        %v655 = vshrl.u32 %v654, 7
        %v656 = vsub.s32 5, %v655
        %v657 = vrot.slane %v598, %v656
        %v658 = vmul.f32 %v657, %v652
        %v659 = vmul.f32 %v657, %v653
        %v660 = vadd.f32 %v650, %v658
        %v661 = vadd.f32 %v651, %v659
        %v662 = vld [vmem:[#allocation2 + $0xa] sm:$0xff]
        %v663 = vld [vmem:[#allocation2 + $0x12] sm:$0xff]
        %v664 = vlaneseq
        %v665 = vshrl.u32 %v664, 7
        %v666 = vsub.s32 6, %v665
        %v667 = vrot.slane %v598, %v666
        %v668 = vmul.f32 %v667, %v662
        %v669 = vmul.f32 %v667, %v663
        %v670 = vadd.f32 %v660, %v668
        %v671 = vadd.f32 %v661, %v669
        %v672 = vld [vmem:[#allocation2 + $0x9] sm:$0xff]
        %v673 = vld [vmem:[#allocation2 + $0x11] sm:$0xff]
        %v674 = vlaneseq
        %v675 = vshrl.u32 %v674, 7
        %v676 = vsub.s32 7, %v675
        %v677 = vrot.slane %v598, %v676
        %v678 = vmul.f32 %v677, %v672
        %v679 = vmul.f32 %v677, %v673
        %v680 = vadd.f32 %v670, %v678
        %v681 = vadd.f32 %v671, %v679
        %v682 = vld [vmem:[#allocation2 + $0x8] sm:$0xff]
        %v683 = vld [vmem:[#allocation2 + $0x10] sm:$0xff]
        %v684 = vlaneseq
        %v685 = vshrl.u32 %v684, 7
        %v686 = vsub.s32 0, %v685
        %v687 = vrot.slane %v599, %v686
        %v688 = vmul.f32 %v687, %v682
        %v689 = vmul.f32 %v687, %v683
        %v690 = vadd.f32 %v680, %v688
        %v691 = vadd.f32 %v681, %v689
        %v692 = vld [vmem:[#allocation2 + $0x7] sm:$0xff]
        %v693 = vlaneseq
        %v694 = vshrl.u32 %v693, 7
        %v695 = vsub.s32 1, %v694
        %v696 = vrot.slane %v599, %v695
        %v697 = vmul.f32 %v696, %v692
        %v698 = vmul.f32 %v696, %v612
        %v699 = vadd.f32 %v690, %v697
        %v700 = vadd.f32 %v691, %v698
        %v701 = vld [vmem:[#allocation2 + $0x6] sm:$0xff]
        %v702 = vlaneseq
        %v703 = vshrl.u32 %v702, 7
        %v704 = vsub.s32 2, %v703
        %v705 = vrot.slane %v599, %v704
        %v706 = vmul.f32 %v705, %v701
        %v707 = vmul.f32 %v705, %v622
        %v708 = vadd.f32 %v699, %v706
        %v709 = vadd.f32 %v700, %v707
        %v710 = vld [vmem:[#allocation2 + $0x5] sm:$0xff]
        %v711 = vlaneseq
        %v712 = vshrl.u32 %v711, 7
        %v713 = vsub.s32 3, %v712
        %v714 = vrot.slane %v599, %v713
        %v715 = vmul.f32 %v714, %v710
        %v716 = vmul.f32 %v714, %v632
        %v717 = vadd.f32 %v708, %v715
        %v718 = vadd.f32 %v709, %v716
        %v719 = vld [vmem:[#allocation2 + $0x4] sm:$0xff]
        %v720 = vlaneseq
        %v721 = vshrl.u32 %v720, 7
        %v722 = vsub.s32 4, %v721
        %v723 = vrot.slane %v599, %v722
        %v724 = vmul.f32 %v723, %v719
        %v725 = vmul.f32 %v723, %v642
        %v726 = vadd.f32 %v717, %v724
        %v727 = vadd.f32 %v718, %v725
        %v728 = vld [vmem:[#allocation2 + $0x3] sm:$0xff]
        %v729 = vlaneseq
        %v730 = vshrl.u32 %v729, 7
        %v731 = vsub.s32 5, %v730
        %v732 = vrot.slane %v599, %v731
        %v733 = vmul.f32 %v732, %v728
        %v734 = vmul.f32 %v732, %v652
        %v735 = vadd.f32 %v726, %v733
        %v736 = vadd.f32 %v727, %v734
        %v737 = vld [vmem:[#allocation2 + $0x2] sm:$0xff]
        %v738 = vlaneseq
        %v739 = vshrl.u32 %v738, 7
        %v740 = vsub.s32 6, %v739
        %v741 = vrot.slane %v599, %v740
        %v742 = vmul.f32 %v741, %v737
        %v743 = vmul.f32 %v741, %v662
        %v744 = vadd.f32 %v735, %v742
        %v745 = vadd.f32 %v736, %v743
        %v746 = vld [vmem:[#allocation2 + $0x1] sm:$0xff]
        %v747 = vlaneseq
        %v748 = vshrl.u32 %v747, 7
        %v749 = vsub.s32 7, %v748
        %v750 = vrot.slane %v599, %v749
        %v751 = vmul.f32 %v750, %v746
        %v752 = vmul.f32 %v750, %v672
        %v753 = vadd.f32 %v744, %v751
        %v754 = vadd.f32 %v745, %v752
        %v755 = vmul.f32 %v753, %v592
        %v756 = vmul.f32 %v754, %v595
        %v757 = vld [vmem:[%s6] sm:$0xff]
        %v758 = vld [vmem:[%s6 + $0x8] sm:$0xff]
        %v759 = vld [vmem:[%s8] sm:$0x1]
        %760 = vst [vmem:[#allocation2 + $0x10] sm:$0xff] %v755
        %761 = vst [vmem:[#allocation2 + $0x18] sm:$0xff] %v756
        %v762 = vadd.f32 %v759, %v757
        %v764 = vlaneseq
        %v765 = vshrl.u32 %v764, 7
        %v766 = vsub.s32 0, %v765
        %v767 = vrot.slane %v762, %v766
        %v769 = vmul.f32 %v767, %v755
        %v770 = vmul.f32 %v767, %v756
        %v771 = vld [vmem:[#allocation2 + $0xf] sm:$0xff]
        %v772 = vld [vmem:[#allocation2 + $0x17] sm:$0xff]
        %v773 = vlaneseq
        %v774 = vshrl.u32 %v773, 7
        %v775 = vsub.s32 1, %v774
        %v776 = vrot.slane %v757, %v775
        %v777 = vmul.f32 %v776, %v771
        %v778 = vmul.f32 %v776, %v772
        %v779 = vadd.f32 %v769, %v777
        %v780 = vadd.f32 %v770, %v778
        %v781 = vld [vmem:[#allocation2 + $0xe] sm:$0xff]
        %v782 = vld [vmem:[#allocation2 + $0x16] sm:$0xff]
        %v783 = vlaneseq
        %v784 = vshrl.u32 %v783, 7
        %v785 = vsub.s32 2, %v784
        %v786 = vrot.slane %v757, %v785
        %v787 = vmul.f32 %v786, %v781
        %v788 = vmul.f32 %v786, %v782
        %v789 = vadd.f32 %v779, %v787
        %v790 = vadd.f32 %v780, %v788
        %v791 = vld [vmem:[#allocation2 + $0xd] sm:$0xff]
        %v792 = vld [vmem:[#allocation2 + $0x15] sm:$0xff]
        %v793 = vlaneseq
        %v794 = vshrl.u32 %v793, 7
        %v795 = vsub.s32 3, %v794
        %v796 = vrot.slane %v757, %v795
        %v797 = vmul.f32 %v796, %v791
        %v798 = vmul.f32 %v796, %v792
        %v799 = vadd.f32 %v789, %v797
        %v800 = vadd.f32 %v790, %v798
        %v801 = vld [vmem:[#allocation2 + $0xc] sm:$0xff]
        %v802 = vld [vmem:[#allocation2 + $0x14] sm:$0xff]
        %v803 = vlaneseq
        %v804 = vshrl.u32 %v803, 7
        %v805 = vsub.s32 4, %v804
        %v806 = vrot.slane %v757, %v805
        %v807 = vmul.f32 %v806, %v801
        %v808 = vmul.f32 %v806, %v802
        %v809 = vadd.f32 %v799, %v807
        %v810 = vadd.f32 %v800, %v808
        %v811 = vld [vmem:[#allocation2 + $0xb] sm:$0xff]
        %v812 = vld [vmem:[#allocation2 + $0x13] sm:$0xff]
        %v813 = vlaneseq
        %v814 = vshrl.u32 %v813, 7
        %v815 = vsub.s32 5, %v814
        %v816 = vrot.slane %v757, %v815
        %v817 = vmul.f32 %v816, %v811
        %v818 = vmul.f32 %v816, %v812
        %v819 = vadd.f32 %v809, %v817
        %v820 = vadd.f32 %v810, %v818
        %v821 = vld [vmem:[#allocation2 + $0xa] sm:$0xff]
        %v822 = vld [vmem:[#allocation2 + $0x12] sm:$0xff]
        %v823 = vlaneseq
        %v824 = vshrl.u32 %v823, 7
        %v825 = vsub.s32 6, %v824
        %v826 = vrot.slane %v757, %v825
        %v827 = vmul.f32 %v826, %v821
        %v828 = vmul.f32 %v826, %v822
        %v829 = vadd.f32 %v819, %v827
        %v830 = vadd.f32 %v820, %v828
        %v831 = vld [vmem:[#allocation2 + $0x9] sm:$0xff]
        %v832 = vld [vmem:[#allocation2 + $0x11] sm:$0xff]
        %v833 = vlaneseq
        %v834 = vshrl.u32 %v833, 7
        %v835 = vsub.s32 7, %v834
        %v836 = vrot.slane %v757, %v835
        %v837 = vmul.f32 %v836, %v831
        %v838 = vmul.f32 %v836, %v832
        %v839 = vadd.f32 %v829, %v837
        %v840 = vadd.f32 %v830, %v838
        %v841 = vld [vmem:[#allocation2 + $0x8] sm:$0xff]
        %v842 = vld [vmem:[#allocation2 + $0x10] sm:$0xff]
        %v843 = vlaneseq
        %v844 = vshrl.u32 %v843, 7
        %v845 = vsub.s32 0, %v844
        %v846 = vrot.slane %v758, %v845
        %v847 = vmul.f32 %v846, %v841
        %v848 = vmul.f32 %v846, %v842
        %v849 = vadd.f32 %v839, %v847
        %v850 = vadd.f32 %v840, %v848
        %v851 = vld [vmem:[#allocation2 + $0x7] sm:$0xff]
        %v852 = vlaneseq
        %v853 = vshrl.u32 %v852, 7
        %v854 = vsub.s32 1, %v853
        %v855 = vrot.slane %v758, %v854
        %v856 = vmul.f32 %v855, %v851
        %v857 = vmul.f32 %v855, %v771
        %v858 = vadd.f32 %v849, %v856
        %v859 = vadd.f32 %v850, %v857
        %v860 = vld [vmem:[#allocation2 + $0x6] sm:$0xff]
        %v861 = vlaneseq
        %v862 = vshrl.u32 %v861, 7
        %v863 = vsub.s32 2, %v862
        %v864 = vrot.slane %v758, %v863
        %v865 = vmul.f32 %v864, %v860
        %v866 = vmul.f32 %v864, %v781
        %v867 = vadd.f32 %v858, %v865
        %v868 = vadd.f32 %v859, %v866
        %v869 = vld [vmem:[#allocation2 + $0x5] sm:$0xff]
        %v870 = vlaneseq
        %v871 = vshrl.u32 %v870, 7
        %v872 = vsub.s32 3, %v871
        %v873 = vrot.slane %v758, %v872
        %v874 = vmul.f32 %v873, %v869
        %v875 = vmul.f32 %v873, %v791
        %v876 = vadd.f32 %v867, %v874
        %v877 = vadd.f32 %v868, %v875
        %v878 = vld [vmem:[#allocation2 + $0x4] sm:$0xff]
        %v879 = vlaneseq
        %v880 = vshrl.u32 %v879, 7
        %v881 = vsub.s32 4, %v880
        %v882 = vrot.slane %v758, %v881
        %v883 = vmul.f32 %v882, %v878
        %v884 = vmul.f32 %v882, %v801
        %v885 = vadd.f32 %v876, %v883
        %v886 = vadd.f32 %v877, %v884
        %v887 = vld [vmem:[#allocation2 + $0x3] sm:$0xff]
        %v888 = vlaneseq
        %v889 = vshrl.u32 %v888, 7
        %v890 = vsub.s32 5, %v889
        %v891 = vrot.slane %v758, %v890
        %v892 = vmul.f32 %v891, %v887
        %v893 = vmul.f32 %v891, %v811
        %v894 = vadd.f32 %v885, %v892
        %v895 = vadd.f32 %v886, %v893
        %v896 = vld [vmem:[#allocation2 + $0x2] sm:$0xff]
        %v897 = vlaneseq
        %v898 = vshrl.u32 %v897, 7
        %v899 = vsub.s32 6, %v898
        %v900 = vrot.slane %v758, %v899
        %v901 = vmul.f32 %v900, %v896
        %v902 = vmul.f32 %v900, %v821
        %v903 = vadd.f32 %v894, %v901
        %v904 = vadd.f32 %v895, %v902
        %v905 = vld [vmem:[#allocation2 + $0x1] sm:$0xff]
        %v906 = vlaneseq
        %v907 = vshrl.u32 %v906, 7
        %v908 = vsub.s32 7, %v907
        %v909 = vrot.slane %v758, %v908
        %v910 = vmul.f32 %v909, %v905
        %v911 = vmul.f32 %v909, %v831
        %v912 = vadd.f32 %v903, %v910
        %v913 = vadd.f32 %v904, %v911
        %v914 = vmul.f32 %v912, %v549
        %v915 = vmul.f32 %v913, %v553
        %v916 = vpack.c.bf16 %v915, %v914
        %v917 = vld [vmem:[%s3] sm:$0xf]
        %v918 = vld [vmem:[%s3 + $0x4] sm:$0xf]
        %v919 = vld [vmem:[%s3 + $0x8] sm:$0xf]
        %v920 = vld [vmem:[%s3 + $0xc] sm:$0xf]
        %v921 = vld [vmem:[%s3 + $0x10] sm:$0xf]
        %v922 = vld [vmem:[%s3 + $0x14] sm:$0xf]
        %v923 = vld [vmem:[%s3 + $0x18] sm:$0xf]
        %v924 = vld [vmem:[%s3 + $0x1c] sm:$0xf]
        %v925 = vld [vmem:[%s3 + $0x20] sm:$0xf]
        %v926 = vld [vmem:[%s3 + $0x24] sm:$0xf]
        %v927 = vld [vmem:[%s3 + $0x28] sm:$0xf]
        %v928 = vld [vmem:[%s3 + $0x2c] sm:$0xf]
        %v929 = vld [vmem:[%s3 + $0x30] sm:$0xf]
        %v930 = vld [vmem:[%s3 + $0x34] sm:$0xf]
        %v931 = vld [vmem:[%s3 + $0x38] sm:$0xf]
        %v932 = vld [vmem:[%s3 + $0x3c] sm:$0xf]
        %v933 = vld [vmem:[%s4] sm:$0x1]
        %v935 = vlaneseq
        %v936 = vshrl.u32 %v935, 7
        %v937 = vsub.s32 0, %v936
        %v938 = vrot.slane %v933, %v937
        %v956 = vunpack.c.l.b16 %v917
        %v957 = vunpack.c.l.b16 %v918
        %v958 = vunpack.c.l.b16 %v919
        %v959 = vunpack.c.l.b16 %v920
        %v960 = vunpack.c.l.b16 %v921
        %v961 = vunpack.c.l.b16 %v922
        %v962 = vunpack.c.l.b16 %v923
        %v963 = vunpack.c.l.b16 %v924
        %v964 = vunpack.c.l.b16 %v925
        %v965 = vunpack.c.l.b16 %v926
        %v966 = vunpack.c.l.b16 %v927
        %v967 = vunpack.c.l.b16 %v928
        %v968 = vunpack.c.l.b16 %v929
        %v969 = vunpack.c.l.b16 %v930
        %v970 = vunpack.c.l.b16 %v931
        %v971 = vunpack.c.l.b16 %v932
        %v972 = vpack.c.b16 %v957, %v956
        %v973 = vpack.c.b16 %v959, %v958
        %v974 = vpack.c.b16 %v961, %v960
        %v975 = vpack.c.b16 %v963, %v962
        %v976 = vpack.c.b16 %v965, %v964
        %v977 = vpack.c.b16 %v967, %v966
        %v978 = vpack.c.b16 %v969, %v968
        %v979 = vpack.c.b16 %v971, %v970
        %988 = vmatprep.subr.bf16.mxu0 0
        %989 = vmatpush1.bf16.msra.mxu0 %v972
        %990 = vmatprep.subr.bf16.mxu0 0
        %991 = vmatpush1.bf16.msra.mxu0 %v973
        %992 = vmatprep.subr.bf16.mxu0 0
        %993 = vmatpush1.bf16.msra.mxu0 %v974
        %994 = vmatprep.subr.bf16.mxu0 0
        %995 = vmatpush1.bf16.msra.mxu0 %v975
        %996 = vmatprep.subr.bf16.mxu0 0
        %997 = vmatpush1.bf16.msra.mxu0 %v976
        %998 = vmatprep.subr.bf16.mxu0 0
        %999 = vmatpush1.bf16.msra.mxu0 %v977
        %1000 = vmatprep.subr.bf16.mxu0 0
        %1001 = vmatpush1.bf16.msra.mxu0 %v978
        %1002 = vmatprep.subr.bf16.mxu0 0
        %1003 = vmatpush1.bf16.msra.mxu0 %v979
        %1004 = vmatprep.subr.bf16.mxu0 0
        %1005 = vmatpush1.bf16.msra.mxu0 0
        %1006 = vmatprep.subr.bf16.mxu0 0
        %1007 = vmatpush1.bf16.msra.mxu0 0
        %1008 = vmatprep.subr.bf16.mxu0 0
        %1009 = vmatpush1.bf16.msra.mxu0 0
        %1010 = vmatprep.subr.bf16.mxu0 0
        %1011 = vmatpush1.bf16.msra.mxu0 0
        %1012 = vmatprep.subr.bf16.mxu0 0
        %1013 = vmatpush1.bf16.msra.mxu0 0
        %1014 = vmatprep.subr.bf16.mxu0 0
        %1015 = vmatpush1.bf16.msra.mxu0 0
        %1016 = vmatprep.subr.bf16.mxu0 0
        %1017 = vmatpush1.bf16.msra.mxu0 0
        %1018 = vmatprep.subr.bf16.mxu0 0
        %1019 = vmatpush1.bf16.msra.mxu0 0
        %1020 = vmatprep.mubr.bf16.mxu0 0
        %1021 = vmatmul.mubr.bf16.gmra.mrb[0].mxu0 %v916
        %v1022 = vpop.f32.mrb[0].mxu0
        %v1023 = vadd.f32 %v938, %v1022
        %v1024 = vpop.f32.mrb[0].mxu0
        %v1025 = vpop.f32.mrb[0].mxu0
        %v1026 = vadd.f32 %v938, %v1025
        %v1027 = vpop.f32.mrb[0].mxu0
        %1028 = vdwg.mxu0
        %1029 = vst [vmem:[%s325] sm:$0xff] %v1023
        %1030 = vst [vmem:[%s325 + $0x8] sm:$0xff] %v1026
        %s1031 = sand.u32 %s225, 1
        %s1032 = scalar_lea.sflag [#allocation4], %s1031
        %s1033 = sand.u32 %s225, 1
        %s1034 = smul.addr %s1033, 16
        %s1035 = scalar_lea.vmem [#allocation3], %s1034
        // Predicated region
        $region57: #{h3_forward.1} parent=55 // pred_check
          %p1036 = pneg %p235
        $region58: #{h3_forward.1} parent=55 // pred_check_branch
          %1038 = sbr.rel (%p1036) target = $region60
        $region59: #{h3_forward.1} parent=55 // pred_region
          %s1040 = ssub.s32 256, 256
          %1041 = vsyncadd %s1032, %s1040
          %s1042 = smul.addr %s23, 2
          %s1043 = smul.addr %s1042, 128
          %s1044 = scalar_lea.hbm %s9, %s1043
          %s1045 = sshll.u32 %s1035, 4
          %s1046 = int_to_ptr.vmem [resolvable:$true] %s1045
          %1051 = dma.vmem_to_hbm [thread:$0]  %s1046, 256, %s1044, %s1032, 128, 128, 8
        $region60: #{h3_forward.1} parent=55 // pred_fallthru
          _
      $region56: #{h3_forward.1} parent=5 // pred_fallthru
        _
      %p1052 = scmp.le.s32.totalorder 2, %s18
      // Predicated region
      $region61: #{h3_forward.1} parent=5 // pred_check
        %p1053 = pneg %p1052
      $region62: #{h3_forward.1} parent=5 // pred_check_branch
        %1055 = sbr.rel (%p1053) target = $region64
      $region63: #{h3_forward.1} parent=5 // pred_region
        %s1056 = ssub.s32 %s18, 2
        // Predicated region
        $region65: #{h3_forward.1} parent=63 // pred_check
          %p1057 = pneg %p241
        $region66: #{h3_forward.1} parent=63 // pred_check_branch
          %1059 = sbr.rel (%p1057) target = $region68
        $region67: #{h3_forward.1} parent=63 // pred_region
          %s1060 = sand.u32 %s226, 1
          %s1061 = scalar_lea.sflag [#allocation4], %s1060
          %s1062 = sand.u32 %s226, 1
          %s1063 = smul.addr %s1062, 16
          %s1064 = scalar_lea.vmem [#allocation3], %s1063
          %1065 = dma.done %s1061, 256
        $region68: #{h3_forward.1} parent=63 // pred_fallthru
          _
      $region64: #{h3_forward.1} parent=5 // pred_fallthru
        _
    $region6: #{h3_forward.1} parent=1 // loop_footer
      %s22 = sadd.s32 1, %s18
    $region7: #{h3_forward.1} parent=1 // loop_footer_branch
      %17 = sbr.rel target = $region3
    $region8: #{h3_forward.1} parent=1 // loop_exit
      _
    %1066 = vsyncpa [#allocation4], 1
    %s1067 = scalar_lea.sflag [#allocation4], 1
    %1068 = vsyncpa %s1067, 1

</llo_original>
